<compile_context>
chip_gen: v7x
topology: tpu7x:2x2x1
jax: 0.10.0
libtpu: 0.0.40
codegen_flags: <defaults>
</compile_context>

<pallas_src>
import jax
import jax.numpy as jnp
from jax.experimental import pallas as pl
from jax.experimental.pallas import tpu as pltpu

DICE_WEIGHT = 0.5
FOCAL_WEIGHT = 0.5
FOCAL_GAMMA = 2.0          # exactly 2 -> implemented as a square on the VPU
FOCAL_ALPHA = 0.25
DICE_SMOOTH_NR = 1e-5      # MONAI DiceLoss defaults
DICE_SMOOTH_DR = 1e-5
FOCAL_EPS = 1e-10

# Per-input, per-pipeline-buffer tile budget (2 inputs x 2 buffers ~= 4x this,
# less for narrow dtypes).  Kept well under the 32 MiB vmem_limit below.
_TILE_BYTES_TARGET = 4 << 20   # 4 MiB
_VMEM_LIMIT_BYTES = 32 * 1024 * 1024


def _make_partials_kernel(hw, tile_hw):
    """Build the per-tile kernel.  Static closure over (hw, tile_hw) so the
    lane mask is only emitted when the last block is ragged."""
    needs_mask = (hw % tile_hw) != 0

    def kernel(x_ref, t_ref, o_ref):
        x = x_ref[...].astype(jnp.float32)
        t = t_ref[...].astype(jnp.float32)

        # sigmoid in tanh form: one EUP op (vs exp + recip).
        p = 0.5 * jnp.tanh(0.5 * x) + 0.5

        if needs_mask:
            # Zero out the padded lanes of the final (partially OOB) block.
            # With p = t = 0 there: dice partials get 0 and pt = 1 ->
            # modulating = 0 -> focal contribution is exactly 0.
            k = pl.program_id(0)
            lane = jax.lax.broadcasted_iota(jnp.int32, x.shape, 1)
            valid = (k * tile_hw + lane) < hw
            p = jnp.where(valid, p, 0.0)
            t = jnp.where(valid, t, 0.0)

        # ---- Dice partial row sums (per (n, c) row) ----
        inter = jnp.sum(p * t, axis=-1, keepdims=True)        # (NC, 1)
        pred_o = jnp.sum(p, axis=-1, keepdims=True)            # (NC, 1)
        ground_o = jnp.sum(t, axis=-1, keepdims=True)          # (NC, 1)

        # ---- Focal partial row sums ----
        # t is a binary {0,1} mask, so these equal the reference where() selects:
        #   pt         = where(t == 1, p, 1 - p)
        #   alpha_fact = where(t == 1, alpha, 1 - alpha)
        pt = 1.0 - t - p + 2.0 * t * p
        alpha_factor = (2.0 * FOCAL_ALPHA - 1.0) * t + (1.0 - FOCAL_ALPHA)
        m = 1.0 - pt
        modulating = m * m                                     # gamma == 2 -> square
        ce = -jnp.log(pt + FOCAL_EPS)
        focal_rows = jnp.sum(alpha_factor * modulating * ce,
                             axis=-1, keepdims=True)           # (NC, 1)

        # Direct column stores (no lane concatenate needed).
        o_ref[0, :, 0:1] = inter
        o_ref[0, :, 1:2] = pred_o
        o_ref[0, :, 2:3] = ground_o
        o_ref[0, :, 3:4] = focal_rows

    return kernel


def _pick_tile_hw(nc, hw, itemsize):
    """Lane-tile size: multiple of 128, sized for ~_TILE_BYTES_TARGET per
    buffer, and capped at ~half the row so the grid has >= 2 blocks (v7x
    megacore).  Small rows fall back to a single full-extent block."""
    if hw < 128:
        return hw
    budget_lanes = (_TILE_BYTES_TARGET // max(1, nc * itemsize)) // 128 * 128
    budget_lanes = max(128, budget_lanes)
    half_lanes = max(128, pl.cdiv(pl.cdiv(hw, 2), 128) * 128)
    return min(budget_lanes, half_lanes)


def combined_loss(inputs, targets, *, tile_hw=None,
                  logits_dtype=None, target_dtype=jnp.bfloat16):
    """0.5 * DiceLoss(sigmoid, include_background, mean) + 0.5 * FocalLoss(2.0, 0.25).

    inputs: logits, (N, C, H, W).  targets: binary {0,1} masks, (N, C, H, W).
    Returns a scalar f32 loss.

    Bandwidth notes (kernel is HBM-bound at f32): targets are cast to
    `target_dtype` (default bf16 — lossless for binary masks); pass
    `logits_dtype=jnp.bfloat16` to also halve logit traffic (tiny numerical
    change).  All arithmetic inside the kernel is f32.
    """
    N, C, H, W = inputs.shape
    nc, hw = N * C, H * W

    x2d = inputs.reshape(nc, hw)
    if logits_dtype is not None:
        x2d = x2d.astype(logits_dtype)
    t2d = targets.reshape(nc, hw).astype(target_dtype)

    itemsize = max(jnp.dtype(x2d.dtype).itemsize, jnp.dtype(t2d.dtype).itemsize)
    if tile_hw is None:
        tile_hw = _pick_tile_hw(nc, hw, itemsize)
    assert tile_hw == hw or tile_hw % 128 == 0, "tile_hw must be a multiple of 128 (or the full HW extent)"
    num_blocks = pl.cdiv(hw, tile_hw)

    parts = pl.pallas_call(
        _make_partials_kernel(hw, tile_hw),
        out_shape=jax.ShapeDtypeStruct((num_blocks, nc, 4), jnp.float32),
        grid_spec=pltpu.PrefetchScalarGridSpec(
            num_scalar_prefetch=0,
            grid=(num_blocks,),
            in_specs=[
                pl.BlockSpec((nc, tile_hw), lambda k: (0, k)),
                pl.BlockSpec((nc, tile_hw), lambda k: (0, k)),
            ],
            out_specs=pl.BlockSpec((1, nc, 4), lambda k: (k, 0, 0)),
        ),
        compiler_params=pltpu.CompilerParams(
            dimension_semantics=("parallel",),      # megacore-shardable on v7x
            vmem_limit_bytes=_VMEM_LIMIT_BYTES,     # room for 4 MiB tiles on v5e too
        ),
    )(x2d, t2d)

    # Tiny final combine in JAX (on (NC, 4) totals) so the grid axis stays parallel.
    sums = jnp.sum(parts, axis=0)                    # (NC, 4)
    inter, pred_o, ground_o, focal_sum = sums[:, 0], sums[:, 1], sums[:, 2], sums[:, 3]

    dice_per = 1.0 - (2.0 * inter + DICE_SMOOTH_NR) / (ground_o + pred_o + DICE_SMOOTH_DR)
    dice = jnp.mean(dice_per)                        # mean over N*C (MONAI 'mean')
    focal = jnp.sum(focal_sum) / (nc * hw)           # mean over the TRUE N*C*H*W

    return DICE_WEIGHT * dice + FOCAL_WEIGHT * focal


def _reference(inputs, targets):
    # Pure-JAX reference mirroring the PyTorch module (where-based selects, float pow).
    x = inputs.astype(jnp.float32)
    t = targets.astype(jnp.float32)
    p = jax.nn.sigmoid(x)
    inter = jnp.sum(p * t, axis=(2, 3))
    denom = jnp.sum(t, axis=(2, 3)) + jnp.sum(p, axis=(2, 3))
    dice = jnp.mean(1.0 - (2.0 * inter + DICE_SMOOTH_NR) / (denom + DICE_SMOOTH_DR))
    pt = jnp.where(t == 1.0, p, 1.0 - p)
    af = jnp.where(t == 1.0, FOCAL_ALPHA, 1.0 - FOCAL_ALPHA)
    focal = jnp.mean(af * (1.0 - pt) ** FOCAL_GAMMA * (-jnp.log(pt + FOCAL_EPS)))
    return DICE_WEIGHT * dice + FOCAL_WEIGHT * focal


if __name__ == "__main__":
    key = jax.random.PRNGKey(0)
    k1, k2 = jax.random.split(key)
    N, C, H, W = 2, 4, 16, 16
    inputs = jax.random.normal(k1, (N, C, H, W), dtype=jnp.float32)              # logits
    targets = (jax.random.uniform(k2, (N, C, H, W)) > 0.7).astype(jnp.float32)   # binary masks

    ref = jax.block_until_ready(_reference(inputs, targets))

    # Default path: f32 logits + bf16 targets, auto tile (hw=256 -> 2 blocks, pipelined).
    loss = jax.block_until_ready(combined_loss(inputs, targets))
    assert jnp.allclose(loss, ref, rtol=1e-4, atol=1e-6), (loss, ref)

    # Bandwidth-optimized path: bf16 logits (small numerical change, looser tolerance).
    loss_bf16 = jax.block_until_ready(combined_loss(inputs, targets, logits_dtype=jnp.bfloat16))
    assert jnp.allclose(loss_bf16, ref, rtol=3e-2, atol=1e-3), (loss_bf16, ref)

    # Ragged spatial extent: hw=180 with 128-lane tiles -> cdiv grid + lane mask in last block.
    H2, W2 = 18, 10
    inputs2 = jax.random.normal(k1, (N, C, H2, W2), dtype=jnp.float32)
    targets2 = (jax.random.uniform(k2, (N, C, H2, W2)) > 0.7).astype(jnp.float32)
    ref2 = jax.block_until_ready(_reference(inputs2, targets2))
    loss2 = jax.block_until_ready(combined_loss(inputs2, targets2, tile_hw=128))
    assert jnp.allclose(loss2, ref2, rtol=1e-4, atol=1e-6), (loss2, ref2)

    print("KERNEL_OK")
</pallas_src>

<mosaic_0001>
module attributes {stable_mosaic.version = 11 : i64} {
  func.func @kernel(%arg0: i32, %arg1: memref<8x128xf32, #tpu.memory_space<vmem>>, %arg2: memref<8x128xbf16, #tpu.memory_space<vmem>>, %arg3: memref<1x8x4xf32, #tpu.memory_space<vmem>>) attributes {dimension_semantics = [#tpu.dimension_semantics<parallel>], iteration_bounds = array<i64: 2>, scalar_prefetch = 0 : i64, scratch_operands = 0 : i64, tpu.core_type = #tpu.core_type<tc>, window_params = [{transform_indices = @transform_0, window_bounds = array<i64: 8, 128>}, {transform_indices = @transform_1, window_bounds = array<i64: 8, 128>}, {transform_indices = @transform_2, window_bounds = array<i64: 1, 8, 4>}]} {
    %c0 = arith.constant 0 : index
    %c0_0 = arith.constant 0 : index
    %0 = vector.load %arg1[%c0, %c0_0] : memref<8x128xf32, #tpu.memory_space<vmem>>, vector<8x128xf32>
    %c0_1 = arith.constant 0 : index
    %c0_2 = arith.constant 0 : index
    %1 = vector.load %arg2[%c0_1, %c0_2] : memref<8x128xbf16, #tpu.memory_space<vmem>>, vector<8x128xbf16>
    %2 = arith.extf %1 : vector<8x128xbf16> to vector<8x128xf32>
    %cst = arith.constant 5.000000e-01 : f32
    %3 = vector.broadcast %cst : f32 to vector<8x128xf32>
    %4 = arith.mulf %3, %0 : vector<8x128xf32>
    %5 = math.tanh %4 : vector<8x128xf32>
    %cst_3 = arith.constant 5.000000e-01 : f32
    %6 = vector.broadcast %cst_3 : f32 to vector<8x128xf32>
    %7 = arith.mulf %6, %5 : vector<8x128xf32>
    %cst_4 = arith.constant 5.000000e-01 : f32
    %8 = vector.broadcast %cst_4 : f32 to vector<8x128xf32>
    %9 = arith.addf %7, %8 : vector<8x128xf32>
    %10 = arith.mulf %9, %2 : vector<8x128xf32>
    %cst_5 = arith.constant dense<0.000000e+00> : vector<8xf32>
    %11 = vector.multi_reduction <add>, %10, %cst_5 [1] : vector<8x128xf32> to vector<8xf32>
    %12 = vector.shape_cast %11 : vector<8xf32> to vector<8x1xf32>
    %cst_6 = arith.constant dense<0.000000e+00> : vector<8xf32>
    %13 = vector.multi_reduction <add>, %9, %cst_6 [1] : vector<8x128xf32> to vector<8xf32>
    %14 = vector.shape_cast %13 : vector<8xf32> to vector<8x1xf32>
    %cst_7 = arith.constant dense<0.000000e+00> : vector<8xf32>
    %15 = vector.multi_reduction <add>, %2, %cst_7 [1] : vector<8x128xf32> to vector<8xf32>
    %16 = vector.shape_cast %15 : vector<8xf32> to vector<8x1xf32>
    %cst_8 = arith.constant 1.000000e+00 : f32
    %17 = vector.broadcast %cst_8 : f32 to vector<8x128xf32>
    %18 = arith.subf %17, %2 : vector<8x128xf32>
    %19 = arith.subf %18, %9 : vector<8x128xf32>
    %cst_9 = arith.constant 2.000000e+00 : f32
    %20 = vector.broadcast %cst_9 : f32 to vector<8x128xf32>
    %21 = arith.mulf %20, %2 : vector<8x128xf32>
    %22 = arith.mulf %21, %9 : vector<8x128xf32>
    %23 = arith.addf %19, %22 : vector<8x128xf32>
    %cst_10 = arith.constant -5.000000e-01 : f32
    %24 = vector.broadcast %cst_10 : f32 to vector<8x128xf32>
    %25 = arith.mulf %24, %2 : vector<8x128xf32>
    %cst_11 = arith.constant 7.500000e-01 : f32
    %26 = vector.broadcast %cst_11 : f32 to vector<8x128xf32>
    %27 = arith.addf %25, %26 : vector<8x128xf32>
    %cst_12 = arith.constant 1.000000e+00 : f32
    %28 = vector.broadcast %cst_12 : f32 to vector<8x128xf32>
    %29 = arith.subf %28, %23 : vector<8x128xf32>
    %30 = arith.mulf %29, %29 : vector<8x128xf32>
    %cst_13 = arith.constant 1.000000e-10 : f32
    %31 = vector.broadcast %cst_13 : f32 to vector<8x128xf32>
    %32 = arith.addf %23, %31 : vector<8x128xf32>
    %33 = math.log %32 : vector<8x128xf32>
    %cst_14 = arith.constant 0.000000e+00 : f32
    %34 = vector.broadcast %cst_14 : f32 to vector<8x128xf32>
    %35 = arith.subf %34, %33 : vector<8x128xf32>
    %36 = arith.mulf %27, %30 : vector<8x128xf32>
    %37 = arith.mulf %36, %35 : vector<8x128xf32>
    %cst_15 = arith.constant dense<0.000000e+00> : vector<8xf32>
    %38 = vector.multi_reduction <add>, %37, %cst_15 [1] : vector<8x128xf32> to vector<8xf32>
    %39 = vector.shape_cast %38 : vector<8xf32> to vector<8x1xf32>
    %c0_16 = arith.constant 0 : index
    %c0_17 = arith.constant 0 : index
    %c0_18 = arith.constant 0 : index
    %40 = vector.load %arg3[%c0_16, %c0_17, %c0_18] : memref<1x8x4xf32, #tpu.memory_space<vmem>>, vector<1x8x1xf32>
    %41 = vector.shape_cast %40 : vector<1x8x1xf32> to vector<8x1xf32>
    %42 = vector.shape_cast %12 : vector<8x1xf32> to vector<1x8x1xf32>
    tpu.vector_store %arg3[%c0_16, %c0_17, %c0_18], %42 {strides = array<i32>} : memref<1x8x4xf32, #tpu.memory_space<vmem>>, vector<1x8x1xf32>,
    %c0_19 = arith.constant 0 : index
    %c0_20 = arith.constant 0 : index
    %c1 = arith.constant 1 : index
    %43 = vector.load %arg3[%c0_19, %c0_20, %c1] : memref<1x8x4xf32, #tpu.memory_space<vmem>>, vector<1x8x1xf32>
    %44 = vector.shape_cast %43 : vector<1x8x1xf32> to vector<8x1xf32>
    %45 = vector.shape_cast %14 : vector<8x1xf32> to vector<1x8x1xf32>
    tpu.vector_store %arg3[%c0_19, %c0_20, %c1], %45 {strides = array<i32>} : memref<1x8x4xf32, #tpu.memory_space<vmem>>, vector<1x8x1xf32>,
    %c0_21 = arith.constant 0 : index
    %c0_22 = arith.constant 0 : index
    %c2 = arith.constant 2 : index
    %46 = vector.load %arg3[%c0_21, %c0_22, %c2] : memref<1x8x4xf32, #tpu.memory_space<vmem>>, vector<1x8x1xf32>
    %47 = vector.shape_cast %46 : vector<1x8x1xf32> to vector<8x1xf32>
    %48 = vector.shape_cast %16 : vector<8x1xf32> to vector<1x8x1xf32>
    tpu.vector_store %arg3[%c0_21, %c0_22, %c2], %48 {strides = array<i32>} : memref<1x8x4xf32, #tpu.memory_space<vmem>>, vector<1x8x1xf32>,
    %c0_23 = arith.constant 0 : index
    %c0_24 = arith.constant 0 : index
    %c3 = arith.constant 3 : index
    %49 = vector.load %arg3[%c0_23, %c0_24, %c3] : memref<1x8x4xf32, #tpu.memory_space<vmem>>, vector<1x8x1xf32>
    %50 = vector.shape_cast %49 : vector<1x8x1xf32> to vector<8x1xf32>
    %51 = vector.shape_cast %39 : vector<8x1xf32> to vector<1x8x1xf32>
    tpu.vector_store %arg3[%c0_23, %c0_24, %c3], %51 {strides = array<i32>} : memref<1x8x4xf32, #tpu.memory_space<vmem>>, vector<1x8x1xf32>,
    return
  }
  func.func @transform_0(%arg0: i32) -> (i32, i32) {
    %c0_i32 = arith.constant 0 : i32
    %c0_i32_0 = arith.constant 0 : i32
    return %c0_i32, %arg0 : i32, i32
  }
  func.func @transform_1(%arg0: i32) -> (i32, i32) {
    %c0_i32 = arith.constant 0 : i32
    %c0_i32_0 = arith.constant 0 : i32
    return %c0_i32, %arg0 : i32, i32
  }
  func.func @transform_2(%arg0: i32) -> (i32, i32, i32) {
    %c0_i32 = arith.constant 0 : i32
    %c0_i32_0 = arith.constant 0 : i32
    %c0_i32_1 = arith.constant 0 : i32
    return %arg0, %c0_i32, %c0_i32_0 : i32, i32, i32
  }
}

</mosaic_0001>

<llo_original>
// kernel: tpu_custom_call.1
$region0: #{tpu_custom_call.1}
  #allocation0 [shape = 'u32[]', space=smem, size = 0x4, offset = 0x4, fixed_abs, tag = 'smem constant byte address 0x4 - core index']
  #allocation1 [shape = 'u32[144,128]{1,0:T(1,128)}', space=vmem, size = 0x12000, scoped, tag = 'internal scratch']
  %s0 = inlined_call_operand.hbm [shape: f32[8,256], index: 0, kind: input, shape index: {}]
  %s1 = inlined_call_operand.hbm [shape: bf16[8,256], index: 1, kind: input, shape index: {}]
  %s2 = inlined_call_operand.vmem [shape: f32[2,8,4], index: 2, kind: output, shape index: {}]
  %s3 = sld [smem:[#allocation0]]
  $region49: #{tpu_custom_call.1} parent=0
    _
  %s5 = ssub.s32 1, %s3
  %s6 = scalar_select 0, %s5, %s3
  $region1: #{tpu_custom_call.1} parent=0
    #allocation2 [shape = 'u8[8192]{0}', space=vmem, size = 0x2000, scoped, tag = 'input window, operand 0']
    #allocation3 [shape = 's32[2]{0}', space=sflag, size = 0x8, scoped, tag = 'scoped memory for tpu_custom_call.1']
    #allocation4 [shape = 'u8[4096]{0}', space=vmem, size = 0x1000, scoped, tag = 'input window, operand 1']
    #allocation5 [shape = 's32[2]{0}', space=sflag, size = 0x8, scoped, tag = 'scoped memory for tpu_custom_call.1']
    %7 = vsyncpa [#allocation3], 0
    %s8 = scalar_lea.sflag [#allocation3], 1
    %9 = vsyncpa %s8, 0
    %10 = vsyncpa [#allocation5], 0
    %s11 = scalar_lea.sflag [#allocation5], 1
    %12 = vsyncpa %s11, 0
    loop: start=0, step=1, limit=4
    $region2: #{tpu_custom_call.1} parent=1 // loop_pre_header
      _
    $region3: #{tpu_custom_call.1} parent=1 // loop_header
      %s14 = sphi 0, %s18
      %p15 = scmp.ge.s32.totalorder %s14, 4
      %s24 = sphi 0, %s26
      %s27 = sphi 0, %s24
      %s28 = sphi 0, %s27
      %s44 = sphi 0, %s28
      %s50 = sphi 0, %s52
      %s53 = sphi 0, %s50
      %s54 = sphi 0, %s53
      %s70 = sphi 0, %s54
      %s76 = sphi 0, %s78
      %s79 = sphi 0, %s76
      %s80 = sphi 0, %s79
      %s96 = sphi 0, %s80
    $region4: #{tpu_custom_call.1} parent=1 // loop_header_branch
      %17 = sbr.rel (%p15) target = $region8
    $region5: #{tpu_custom_call.1} parent=1 // loop_body
      %s19 = ssub.s32 %s14, 1
      %s20 = ssub.s32 %s14, 2
      %s21 = sadd.s32 %s14, 1
      %s22 = ssub.s32 %s14, %s21
      %p23 = scmp.eq.s32.totalorder %s22, 0
      %s25 = sadd.s32 %s24, 1
      %s26 = scalar_select %p23, %s24, %s25
      %p29 = pneg %p23
      %p30 = scmp.eq.s32.totalorder %s14, 1
      %p31 = por %p29, %p30
      %p32 = scmp.ne.s32.totalorder %s24, %s27
      %p33 = scmp.eq.s32.totalorder %s14, 0
      %p34 = por %p32, %p33
      %p35 = scmp.ne.s32.totalorder %s24, %s27
      %p36 = scmp.eq.s32.totalorder %s19, 1
      %p37 = por %p35, %p36
      %p38 = scmp.ne.s32.totalorder %s27, %s28
      %p39 = scmp.eq.s32.totalorder %s19, 0
      %p40 = por %p38, %p39
      %p41 = scmp.ne.s32.totalorder %s27, %s28
      %p42 = scmp.eq.s32.totalorder %s20, 1
      %p43 = por %p41, %p42
      %p45 = scmp.ne.s32.totalorder %s28, %s44
      %p46 = scmp.eq.s32.totalorder %s20, 0
      %p47 = por %p45, %p46
      %s48 = ssub.s32 %s14, %s21
      %p49 = scmp.eq.s32.totalorder %s48, 0
      %s51 = sadd.s32 %s50, 1
      %s52 = scalar_select %p49, %s50, %s51
      %p55 = pneg %p49
      %p56 = scmp.eq.s32.totalorder %s14, 1
      %p57 = por %p55, %p56
      %p58 = scmp.ne.s32.totalorder %s50, %s53
      %p59 = scmp.eq.s32.totalorder %s14, 0
      %p60 = por %p58, %p59
      %p61 = scmp.ne.s32.totalorder %s50, %s53
      %p62 = scmp.eq.s32.totalorder %s19, 1
      %p63 = por %p61, %p62
      %p64 = scmp.ne.s32.totalorder %s53, %s54
      %p65 = scmp.eq.s32.totalorder %s19, 0
      %p66 = por %p64, %p65
      %p67 = scmp.ne.s32.totalorder %s53, %s54
      %p68 = scmp.eq.s32.totalorder %s20, 1
      %p69 = por %p67, %p68
      %p71 = scmp.ne.s32.totalorder %s54, %s70
      %p72 = scmp.eq.s32.totalorder %s20, 0
      %p73 = por %p71, %p72
      %s74 = ssub.s32 %s14, %s21
      %p75 = scmp.eq.s32.totalorder %s74, 0
      %s77 = sadd.s32 %s76, 1
      %s78 = scalar_select %p75, %s76, %s77
      %p81 = pneg %p75
      %p82 = scmp.eq.s32.totalorder %s14, 1
      %p83 = por %p81, %p82
      %p84 = scmp.ne.s32.totalorder %s76, %s79
      %p85 = scmp.eq.s32.totalorder %s14, 0
      %p86 = por %p84, %p85
      %p87 = scmp.ne.s32.totalorder %s76, %s79
      %p88 = scmp.eq.s32.totalorder %s19, 1
      %p89 = por %p87, %p88
      %p90 = scmp.ne.s32.totalorder %s79, %s80
      %p91 = scmp.eq.s32.totalorder %s19, 0
      %p92 = por %p90, %p91
      %p93 = scmp.ne.s32.totalorder %s79, %s80
      %p94 = scmp.eq.s32.totalorder %s20, 1
      %p95 = por %p93, %p94
      %p97 = scmp.ne.s32.totalorder %s80, %s96
      %p98 = scmp.eq.s32.totalorder %s20, 0
      %p99 = por %p97, %p98
      %p100 = scmp.le.s32.totalorder 1, %s14
      %p101 = scmp.lt.s32.totalorder %s14, 3
      %p102 = pnand %p100, %p101
      %p103 = pneg %p102
      // Predicated region
      $region9: #{tpu_custom_call.1} parent=5 // pred_check
        _
      $region10: #{tpu_custom_call.1} parent=5 // pred_check_branch
        %105 = sbr.rel (%p102) target = $region12
      $region11: #{tpu_custom_call.1} parent=5 // pred_region
        %s106 = ssub.s32 %s14, 1
      $region12: #{tpu_custom_call.1} parent=5 // pred_fallthru
        _
      %p107 = scmp.lt.s32.totalorder %s14, 2
      // Predicated region
      $region13: #{tpu_custom_call.1} parent=5 // pred_check
        %p108 = pneg %p107
      $region14: #{tpu_custom_call.1} parent=5 // pred_check_branch
        %110 = sbr.rel (%p108) target = $region16
      $region15: #{tpu_custom_call.1} parent=5 // pred_region
        // Predicated region
        $region17: #{tpu_custom_call.1} parent=15 // pred_check
          %p111 = pneg %p34
        $region18: #{tpu_custom_call.1} parent=15 // pred_check_branch
          %113 = sbr.rel (%p111) target = $region20
        $region19: #{tpu_custom_call.1} parent=15 // pred_region
          %s114 = sand.u32 %s24, 1
          %s115 = scalar_lea.sflag [#allocation3], %s114
          %s116 = sand.u32 %s24, 1
          %s117 = smul.addr %s116, 8
          %s118 = scalar_lea.vmem [#allocation2], %s117
          %s120 = ssub.s32 128, 128
          %121 = vsyncadd %s115, %s120
          %s122 = smul.addr %s14, 128
          %s123 = scalar_lea.hbm %s0, %s122
          %s125 = sshll.u32 %s118, 4
          %s126 = int_to_ptr.vmem [resolvable:$true] %s125
          %128 = dma.hbm_to_vmem [thread:$0]  %s123, 128, %s126, %s115
        $region20: #{tpu_custom_call.1} parent=15 // pred_fallthru
          _
        // Predicated region
        $region21: #{tpu_custom_call.1} parent=15 // pred_check
          %p129 = pneg %p60
        $region22: #{tpu_custom_call.1} parent=15 // pred_check_branch
          %131 = sbr.rel (%p129) target = $region24
        $region23: #{tpu_custom_call.1} parent=15 // pred_region
          %s132 = sand.u32 %s50, 1
          %s133 = scalar_lea.sflag [#allocation5], %s132
          %s134 = sand.u32 %s50, 1
          %s135 = smul.addr %s134, 4
          %s136 = scalar_lea.vmem [#allocation4], %s135
          %s138 = ssub.s32 64, 64
          %139 = vsyncadd %s133, %s138
          %s140 = smul.addr %s14, 64
          %s141 = scalar_lea.hbm %s1, %s140
          %s143 = sshll.u32 %s136, 4
          %s144 = int_to_ptr.vmem [resolvable:$true] %s143
          %146 = dma.hbm_to_vmem [thread:$0]  %s141, 64, %s144, %s133
        $region24: #{tpu_custom_call.1} parent=15 // pred_fallthru
          _
      $region16: #{tpu_custom_call.1} parent=5 // pred_fallthru
        _
      %p147 = scmp.le.s32.totalorder 1, %s14
      %p148 = scmp.lt.s32.totalorder %s14, 3
      %p149 = pnand %p147, %p148
      %p150 = pneg %p149
      // Predicated region
      $region25: #{tpu_custom_call.1} parent=5 // pred_check
        _
      $region26: #{tpu_custom_call.1} parent=5 // pred_check_branch
        %152 = sbr.rel (%p149) target = $region28
      $region27: #{tpu_custom_call.1} parent=5 // pred_region
        %s153 = ssub.s32 %s14, 1
        %s154 = sand.u32 %s27, 1
        %s155 = scalar_lea.sflag [#allocation3], %s154
        %s156 = sand.u32 %s27, 1
        %s157 = smul.addr %s156, 8
        %s158 = scalar_lea.vmem [#allocation2], %s157
        // Predicated region
        $region29: #{tpu_custom_call.1} parent=27 // pred_check
          %p159 = pneg %p40
        $region30: #{tpu_custom_call.1} parent=27 // pred_check_branch
          %161 = sbr.rel (%p159) target = $region32
        $region31: #{tpu_custom_call.1} parent=27 // pred_region
          %162 = dma.done %s155, 128
        $region32: #{tpu_custom_call.1} parent=27 // pred_fallthru
          _
        %s163 = sand.u32 %s53, 1
        %s164 = scalar_lea.sflag [#allocation5], %s163
        %s165 = sand.u32 %s53, 1
        %s166 = smul.addr %s165, 4
        %s167 = scalar_lea.vmem [#allocation4], %s166
        // Predicated region
        $region33: #{tpu_custom_call.1} parent=27 // pred_check
          %p168 = pneg %p66
        $region34: #{tpu_custom_call.1} parent=27 // pred_check_branch
          %170 = sbr.rel (%p168) target = $region36
        $region35: #{tpu_custom_call.1} parent=27 // pred_region
          %171 = dma.done %s164, 64
        $region36: #{tpu_custom_call.1} parent=27 // pred_fallthru
          _
        %s172 = sand.u32 %s27, 1
        %s173 = scalar_lea.sflag [#allocation3], %s172
        %s174 = sand.u32 %s27, 1
        %s175 = smul.addr %s174, 8
        %s176 = scalar_lea.vmem [#allocation2], %s175
        %p177 = pneg %p40
        %p178 = pneg %p37
        %s179 = sand.u32 %s53, 1
        %s180 = scalar_lea.sflag [#allocation5], %s179
        %s181 = sand.u32 %s53, 1
        %s182 = smul.addr %s181, 4
        %s183 = scalar_lea.vmem [#allocation4], %s182
        %p184 = pneg %p66
        %p185 = pneg %p63
        %p186 = pneg %p92
        %p187 = pneg %p89
        %p188 = scmp.lt.s32.totalorder %s19, 1
        %s189 = scalar_select %p188, %s19, 1
        %s190 = smul.addr %s189, 8
        %s191 = scalar_lea.vmem %s2, %s190
        %p192 = scmp.lt.s32.totalorder %s19, 1
        %s193 = scalar_select %p192, %s19, 1
        %s194 = smul.addr %s193, 8
        %s195 = scalar_lea.vmem %s2, %s194
        %v196 = vld [vmem:[%s158] sm:$0xff]
        %v197 = vld [vmem:[%s167] sm:$0xf]
        %v198 = vunpack.c.l.bf16 %v197
        %v199 = vmul.f32 %v196, 0.5
        %v200 = vtanh.pop %v199
        %v201 = vmul.f32 %v200, 0.5
        %v202 = vadd.f32 %v201, 0.5
        %v203 = vmul.f32 %v202, %v198
        %204 = vadd.xlane.f32.xlu0 %v203
        %v205 = vpop.xlane.xlu0 %204
        %206 = vadd.xlane.f32.xlu0 %v202
        %v207 = vpop.xlane.xlu0 %206
        %208 = vadd.xlane.f32.xlu0 %v198
        %v209 = vpop.xlane.xlu0 %208
        %v210 = vsub.f32 1.0, %v198
        %v211 = vsub.f32 %v210, %v202
        %v212 = vmul.f32 %v198, 2.0
        %v213 = vmul.f32 %v212, %v202
        %v214 = vadd.f32 %v211, %v213
        %v215 = vmul.f32 %v198, -0.5
        %v216 = vadd.f32 %v215, 0.75
        %v217 = vsub.f32 1.0, %v214
        %v218 = vmul.f32 %v217, %v217
        %v219 = vadd.f32 %v214, 1e-10
        %v220 = vlog2.pop %v219
        %v221 = vmul.f32 %v220, 0.6931472
        %v222 = vsub.f32 0.0, %v221
        %v223 = vmul.f32 %v216, %v218
        %v224 = vmul.f32 %v223, %v222
        %225 = vadd.xlane.f32.xlu0 %v224
        %v226 = vpop.xlane.xlu0 %225
        %vm227 = vcmask 7168
        %228 = vst.msk [vmem:[%s195] sm:$0xff] %vm227, %v205
        %vm229 = vcmask 15368
        %230 = vst.msk [vmem:[%s195] sm:$0xff] %vm229, %v207
        %vm231 = vcmask 23568
        %232 = vst.msk [vmem:[%s195] sm:$0xff] %vm231, %v209
        %vm233 = vcmask 31768
        %234 = vst.msk [vmem:[%s195] sm:$0xff] %vm233, %v226
        %p235 = scmp.lt.s32.totalorder %s19, 1
        %s236 = scalar_select %p235, %s19, 1
        %s237 = smul.addr %s236, 8
        %s238 = scalar_lea.vmem %s2, %s237
        // Predicated region
        $region37: #{tpu_custom_call.1} parent=27 // pred_check
          %p239 = pneg %p89
        $region38: #{tpu_custom_call.1} parent=27 // pred_check_branch
          %241 = sbr.rel (%p239) target = $region40
        $region39: #{tpu_custom_call.1} parent=27 // pred_region
          _
        $region40: #{tpu_custom_call.1} parent=27 // pred_fallthru
          _
      $region28: #{tpu_custom_call.1} parent=5 // pred_fallthru
        _
      %p242 = scmp.le.s32.totalorder 2, %s14
      // Predicated region
      $region41: #{tpu_custom_call.1} parent=5 // pred_check
        %p243 = pneg %p242
      $region42: #{tpu_custom_call.1} parent=5 // pred_check_branch
        %245 = sbr.rel (%p243) target = $region44
      $region43: #{tpu_custom_call.1} parent=5 // pred_region
        %s246 = ssub.s32 %s14, 2
        // Predicated region
        $region45: #{tpu_custom_call.1} parent=43 // pred_check
          %p247 = pneg %p95
        $region46: #{tpu_custom_call.1} parent=43 // pred_check_branch
          %249 = sbr.rel (%p247) target = $region48
        $region47: #{tpu_custom_call.1} parent=43 // pred_region
          %p250 = scmp.lt.s32.totalorder %s20, 1
          %s251 = scalar_select %p250, %s20, 1
          %s252 = smul.addr %s251, 8
          %s253 = scalar_lea.vmem %s2, %s252
        $region48: #{tpu_custom_call.1} parent=43 // pred_fallthru
          _
      $region44: #{tpu_custom_call.1} parent=5 // pred_fallthru
        _
    $region6: #{tpu_custom_call.1} parent=1 // loop_footer
      %s18 = sadd.s32 1, %s14
    $region7: #{tpu_custom_call.1} parent=1 // loop_footer_branch
      %13 = sbr.rel target = $region3
    $region8: #{tpu_custom_call.1} parent=1 // loop_exit
      _
    %254 = vsyncpa [#allocation3], 1
    %s255 = scalar_lea.sflag [#allocation3], 1
    %256 = vsyncpa %s255, 1
    %257 = vsyncpa [#allocation5], 1
    %s258 = scalar_lea.sflag [#allocation5], 1
    %259 = vsyncpa %s258, 1

</llo_original>
